<compile_context>
chip_gen: v6e
topology: v6e:2x2x1
jax: 0.10.0
libtpu: 0.0.40
codegen_flags: <defaults>
</compile_context>

<pallas_src>
import functools

import jax
import jax.numpy as jnp
from jax.experimental import pallas as pl
from jax.experimental.pallas import tpu as pltpu
from jax.scipy.special import logsumexp as _jsp_logsumexp


_PAD_NEG = -1e30  # acts as -inf for masked logits columns but keeps exp/log finite


def _cdiv(a, b):
    return -(-a // b)


def _round_up(a, b):
    return _cdiv(a, b) * b


def _f32(x):
    return x if x.dtype == jnp.float32 else x.astype(jnp.float32)


def _vmem_limit_bytes():
    """Scoped-VMEM limit, guaranteed legal per-TensorCore on every generation.

    Clamped to 56 MiB so it stays < 64 MiB even if get_tpu_info() reports chip-level
    capacity on v7x (2 TCs x 64 MiB); on v5e/v6e (128 MiB) 56 MiB is still far more
    than this streaming kernel needs (tile-size benefit saturates well below that).
    """
    cap = 64 * 1024 * 1024
    try:
        info = pltpu.get_tpu_info()
        for name in ("vmem_capacity_bytes", "vmem_size_bytes", "vmem_bytes"):
            v = getattr(info, name, None)
            if v:
                cap = int(v)
                break
    except Exception:
        pass
    return min(cap * 3 // 4, 56 * 1024 * 1024)


# ----------------------------------------------------------------------------
# single-pass kernel: whole N row fits in one VMEM block
# ----------------------------------------------------------------------------
def _fused_kernel(lt_ref, lb_ref, a_ref, o_ref):
    lt = _f32(lt_ref[...])
    lb = _f32(lb_ref[...])

    mt = jnp.max(lt, axis=-1, keepdims=True)
    lse_t = mt + jnp.log(jnp.sum(jnp.exp(lt - mt), axis=-1, keepdims=True))
    mb = jnp.max(lb, axis=-1, keepdims=True)
    lse_b = mb + jnp.log(jnp.sum(jnp.exp(lb - mb), axis=-1, keepdims=True))

    # logaddexp(a + log_p, log_q) with the per-row constant hoisted out of the
    # elementwise path:
    c = _f32(a_ref[...]) - lse_t + lse_b          # (bm, 1)
    d = (lt - lb) + c                             # = x - y
    o_ref[...] = ((lb - lse_b) + jnp.maximum(d, 0.0)
                  + jnp.log1p(jnp.exp(-jnp.abs(d)))).astype(o_ref.dtype)


# ----------------------------------------------------------------------------
# large-N fallback, pass 1: per-(row, N-block) partial logsumexp.
# Grid is parallel in BOTH batch and N; each block writes its partial lse
# broadcast across a 128-lane output tile (combined in a tiny JAX epilogue).
# ----------------------------------------------------------------------------
def _partial_lse_kernel(lt_ref, lb_ref, pt_ref, pb_ref, *, n_valid, bn, needs_mask):
    lt = _f32(lt_ref[...])
    lb = _f32(lb_ref[...])
    if needs_mask:
        col = pl.program_id(1) * bn + jax.lax.broadcasted_iota(jnp.int32, lt.shape, 1)
        valid = col < n_valid
        lt = jnp.where(valid, lt, _PAD_NEG)   # mask BEFORE both max and exp-sum
        lb = jnp.where(valid, lb, _PAD_NEG)

    mt = jnp.max(lt, axis=-1, keepdims=True)
    pt = mt + jnp.log(jnp.sum(jnp.exp(lt - mt), axis=-1, keepdims=True))
    mb = jnp.max(lb, axis=-1, keepdims=True)
    pb = mb + jnp.log(jnp.sum(jnp.exp(lb - mb), axis=-1, keepdims=True))

    pt_ref[...] = jnp.broadcast_to(pt, pt_ref.shape)
    pb_ref[...] = jnp.broadcast_to(pb, pb_ref.shape)


# ----------------------------------------------------------------------------
# large-N fallback, pass 2: fully parallel elementwise emit.
# ----------------------------------------------------------------------------
def _emit_kernel(lt_ref, lb_ref, a_ref, lset_ref, lseb_ref, o_ref):
    lt = _f32(lt_ref[...])
    lb = _f32(lb_ref[...])
    lse_b = lseb_ref[...]
    c = a_ref[...] - lset_ref[...] + lse_b        # (bm, 1)
    d = (lt - lb) + c
    o_ref[...] = ((lb - lse_b) + jnp.maximum(d, 0.0)
                  + jnp.log1p(jnp.exp(-jnp.abs(d)))).astype(o_ref.dtype)


# ----------------------------------------------------------------------------
# wrapper
# ----------------------------------------------------------------------------
def additive_target_bias(logits_t, logits_b, a, *, out_dtype=None,
                         force_online=False, online_bn=None, interpret=False):
    """Pallas TPU implementation of AdditiveTargetBias.forward (inference path).

    logits_t, logits_b: (B, N) float32 or bfloat16
    a:                  (B, 1)
    returns:            (B, N), dtype = promotion of the inputs (or `out_dtype`)
    """
    B, N = logits_t.shape
    assert logits_b.shape == (B, N), "logits_t / logits_b shape mismatch"
    assert a.shape == (B, 1), "a must be (B, 1)"

    if out_dtype is None:
        out_dtype = jnp.result_type(logits_t.dtype, logits_b.dtype, a.dtype)
    # `a` is tiny: keep it f32 so the (bm, 1) side input never needs sub-32-bit packing.
    a = a.astype(jnp.float32)

    it_t = jnp.dtype(logits_t.dtype).itemsize
    it_b = jnp.dtype(logits_b.dtype).itemsize
    it_o = jnp.dtype(out_dtype).itemsize
    sublane = {4: 8, 2: 16, 1: 32}.get(min(it_t, it_b, it_o), 8)

    vmem_limit = _vmem_limit_bytes()
    # 60% of the limit for pipelined blocks; the rest is headroom for Mosaic internal
    # scratch and the f32 compute temporaries (esp. with bf16 inputs).
    tile_budget = vmem_limit * 3 // 5

    # bytes/element of a block: double-buffered in/out + ~3 f32 temp tiles
    elem_bytes = 2 * it_t + 2 * it_b + 2 * it_o + 3 * 4
    fused_row_bytes = N * elem_bytes

    use_online = force_online or fused_row_bytes * sublane > tile_budget

    compiler_params_1d = pltpu.CompilerParams(
        dimension_semantics=("parallel",), vmem_limit_bytes=vmem_limit)
    compiler_params_2d = pltpu.CompilerParams(
        dimension_semantics=("parallel", "parallel"), vmem_limit_bytes=vmem_limit)

    if not use_online:
        # ---- single-pass path: full-N blocks, grid over batch only --------------
        if B <= sublane:
            bm = B                      # full-dim block (legal even if not %8)
        else:
            bm_budget = max(sublane,
                            (tile_budget // fused_row_bytes) // sublane * sublane)
            max_steps = _cdiv(B, sublane)
            # >=2 blocks shards v7x's two TensorCores; a few blocks also give the
            # pipeline DMA/compute overlap. Cheap (~0.35us/step) on v5e/v6e too.
            target_steps = min(4, max_steps)
            bm_cap = _round_up(_cdiv(B, target_steps), sublane)
            bm = max(sublane, min(bm_budget, bm_cap))

        return pl.pallas_call(
            _fused_kernel,
            out_shape=jax.ShapeDtypeStruct((B, N), out_dtype),
            grid=(_cdiv(B, bm),),
            in_specs=[
                pl.BlockSpec((bm, N), lambda i: (i, 0)),
                pl.BlockSpec((bm, N), lambda i: (i, 0)),
                pl.BlockSpec((bm, 1), lambda i: (i, 0)),
            ],
            out_specs=pl.BlockSpec((bm, N), lambda i: (i, 0)),
            compiler_params=compiler_params_1d,
            interpret=interpret,
        )(logits_t, logits_b, a)

    # ---- vocab-scale N fallback: two passes, both fully parallel grids ----------
    bm1 = B if B <= sublane else sublane
    if online_bn is not None:
        bn = _round_up(online_bn, 128)
    else:
        bn = max(128, (tile_budget // (bm1 * elem_bytes)) // 128 * 128)
    bn = min(bn, _round_up(N, 128))
    n_steps = _cdiv(N, bn)
    needs_mask = (N % bn) != 0

    # pass 1: partial per-row logsumexp for both logits streams
    part_t, part_b = pl.pallas_call(
        functools.partial(_partial_lse_kernel, n_valid=N, bn=bn, needs_mask=needs_mask),
        out_shape=(jax.ShapeDtypeStruct((B, n_steps * 128), jnp.float32),
                   jax.ShapeDtypeStruct((B, n_steps * 128), jnp.float32)),
        grid=(_cdiv(B, bm1), n_steps),
        in_specs=[
            pl.BlockSpec((bm1, bn), lambda i, j: (i, j)),
            pl.BlockSpec((bm1, bn), lambda i, j: (i, j)),
        ],
        out_specs=(
            pl.BlockSpec((bm1, 128), lambda i, j: (i, j)),
            pl.BlockSpec((bm1, 128), lambda i, j: (i, j)),
        ),
        compiler_params=compiler_params_2d,
        interpret=interpret,
    )(logits_t, logits_b)

    # tiny epilogue: combine per-block partials into exact per-row lse (B x n_steps)
    pt = part_t.reshape(B, n_steps, 128)[:, :, 0]
    pb = part_b.reshape(B, n_steps, 128)[:, :, 0]
    lse_t = _jsp_logsumexp(pt, axis=1, keepdims=True)
    lse_b = _jsp_logsumexp(pb, axis=1, keepdims=True)

    # pass 2: fully parallel elementwise emit
    return pl.pallas_call(
        _emit_kernel,
        out_shape=jax.ShapeDtypeStruct((B, N), out_dtype),
        grid=(_cdiv(B, bm1), n_steps),
        in_specs=[
            pl.BlockSpec((bm1, bn), lambda i, j: (i, j)),
            pl.BlockSpec((bm1, bn), lambda i, j: (i, j)),
            pl.BlockSpec((bm1, 1), lambda i, j: (i, 0)),
            pl.BlockSpec((bm1, 1), lambda i, j: (i, 0)),
            pl.BlockSpec((bm1, 1), lambda i, j: (i, 0)),
        ],
        out_specs=pl.BlockSpec((bm1, bn), lambda i, j: (i, j)),
        compiler_params=compiler_params_2d,
        interpret=interpret,
    )(logits_t, logits_b, a, lse_t, lse_b)


# TODO(synk): stop_bias_gradient / detach is a training-time autograd control with no
# effect on the forward computation, so it is intentionally not represented here.


def _reference(logits_t, logits_b, a):
    logits_t = logits_t.astype(jnp.float32)
    logits_b = logits_b.astype(jnp.float32)
    a = a.astype(jnp.float32)
    log_p = logits_t - _jsp_logsumexp(logits_t, axis=1, keepdims=True)
    log_q = logits_b - _jsp_logsumexp(logits_b, axis=1, keepdims=True)
    x = a + log_p
    y = log_q
    m = jnp.maximum(x, y)
    return m + jnp.log1p(jnp.exp(-jnp.abs(x - y)))


if __name__ == "__main__":
    key = jax.random.PRNGKey(0)
    k1, k2, k3 = jax.random.split(key, 3)

    def check(lt, lb, a, atol=1e-4, **kw):
        out = jax.block_until_ready(additive_target_bias(lt, lb, a, **kw))
        ref = _reference(lt, lb, a)
        assert out.shape == ref.shape
        err = float(jnp.max(jnp.abs(out.astype(jnp.float32) - ref)))
        assert err <= atol, f"max abs err {err}"

    # 1) aligned shapes -> fused single-pass path
    B, N = 8, 128
    lt = jax.random.normal(k1, (B, N), dtype=jnp.float32)
    lb = jax.random.normal(k2, (B, N), dtype=jnp.float32)
    a = jax.random.normal(k3, (B, 1), dtype=jnp.float32)
    check(lt, lb, a)

    # 2) ragged shapes -> no host-side padding; exercises partial edge batch blocks
    B2, N2 = 10, 200
    lt2 = jax.random.normal(k1, (B2, N2), dtype=jnp.float32)
    lb2 = jax.random.normal(k2, (B2, N2), dtype=jnp.float32)
    a2 = jax.random.normal(k3, (B2, 1), dtype=jnp.float32)
    check(lt2, lb2, a2)

    # 3) forced two-pass fallback (vocab-scale N path) with ragged N -> column masking
    B3, N3 = 6, 300
    lt3 = jax.random.normal(k1, (B3, N3), dtype=jnp.float32)
    lb3 = jax.random.normal(k2, (B3, N3), dtype=jnp.float32)
    a3 = jax.random.normal(k3, (B3, 1), dtype=jnp.float32)
    check(lt3, lb3, a3, force_online=True, online_bn=128)

    # 4) bf16 logits, f32 `a` -> f32 output via dtype promotion
    check(lt.astype(jnp.bfloat16), lb.astype(jnp.bfloat16), a, atol=1e-3)

    print("KERNEL_OK")
</pallas_src>

<mosaic_0001>
module attributes {stable_mosaic.version = 11 : i64} {
  func.func @_fused_kernel(%arg0: i32, %arg1: memref<8x128xf32, #tpu.memory_space<vmem>>, %arg2: memref<8x128xf32, #tpu.memory_space<vmem>>, %arg3: memref<8x1xf32, #tpu.memory_space<vmem>>, %arg4: memref<8x128xf32, #tpu.memory_space<vmem>>) attributes {dimension_semantics = [#tpu.dimension_semantics<parallel>], iteration_bounds = array<i64: 1>, scalar_prefetch = 0 : i64, scratch_operands = 0 : i64, tpu.core_type = #tpu.core_type<tc>, window_params = [{transform_indices = @transform_0, window_bounds = array<i64: 8, 128>}, {transform_indices = @transform_1, window_bounds = array<i64: 8, 128>}, {transform_indices = @transform_2, window_bounds = array<i64: 8, 1>}, {transform_indices = @transform_3, window_bounds = array<i64: 8, 128>}]} {
    %c0 = arith.constant 0 : index
    %c0_0 = arith.constant 0 : index
    %0 = vector.load %arg1[%c0, %c0_0] : memref<8x128xf32, #tpu.memory_space<vmem>>, vector<8x128xf32>
    %c0_1 = arith.constant 0 : index
    %c0_2 = arith.constant 0 : index
    %1 = vector.load %arg2[%c0_1, %c0_2] : memref<8x128xf32, #tpu.memory_space<vmem>>, vector<8x128xf32>
    %cst = arith.constant dense<0xFF800000> : vector<8xf32>
    %2 = vector.multi_reduction <maximumf>, %0, %cst [1] : vector<8x128xf32> to vector<8xf32>
    %3 = vector.shape_cast %2 : vector<8xf32> to vector<8x1xf32>
    %4 = vector.broadcast %3 : vector<8x1xf32> to vector<8x128xf32>
    %5 = arith.subf %0, %4 : vector<8x128xf32>
    %6 = math.exp %5 : vector<8x128xf32>
    %cst_3 = arith.constant dense<0.000000e+00> : vector<8xf32>
    %7 = vector.multi_reduction <add>, %6, %cst_3 [1] : vector<8x128xf32> to vector<8xf32>
    %8 = vector.shape_cast %7 : vector<8xf32> to vector<8x1xf32>
    %9 = math.log %8 : vector<8x1xf32>
    %10 = arith.addf %3, %9 : vector<8x1xf32>
    %cst_4 = arith.constant dense<0xFF800000> : vector<8xf32>
    %11 = vector.multi_reduction <maximumf>, %1, %cst_4 [1] : vector<8x128xf32> to vector<8xf32>
    %12 = vector.shape_cast %11 : vector<8xf32> to vector<8x1xf32>
    %13 = vector.broadcast %12 : vector<8x1xf32> to vector<8x128xf32>
    %14 = arith.subf %1, %13 : vector<8x128xf32>
    %15 = math.exp %14 : vector<8x128xf32>
    %cst_5 = arith.constant dense<0.000000e+00> : vector<8xf32>
    %16 = vector.multi_reduction <add>, %15, %cst_5 [1] : vector<8x128xf32> to vector<8xf32>
    %17 = vector.shape_cast %16 : vector<8xf32> to vector<8x1xf32>
    %18 = math.log %17 : vector<8x1xf32>
    %19 = arith.addf %12, %18 : vector<8x1xf32>
    %c0_6 = arith.constant 0 : index
    %c0_7 = arith.constant 0 : index
    %20 = vector.load %arg3[%c0_6, %c0_7] : memref<8x1xf32, #tpu.memory_space<vmem>>, vector<8x1xf32>
    %21 = arith.subf %20, %10 : vector<8x1xf32>
    %22 = arith.addf %21, %19 : vector<8x1xf32>
    %23 = arith.subf %0, %1 : vector<8x128xf32>
    %24 = vector.broadcast %22 : vector<8x1xf32> to vector<8x128xf32>
    %25 = arith.addf %23, %24 : vector<8x128xf32>
    %26 = vector.broadcast %19 : vector<8x1xf32> to vector<8x128xf32>
    %27 = arith.subf %1, %26 : vector<8x128xf32>
    %cst_8 = arith.constant 0.000000e+00 : f32
    %28 = vector.broadcast %cst_8 : f32 to vector<8x128xf32>
    %29 = arith.maximumf %25, %28 : vector<8x128xf32>
    %30 = arith.addf %27, %29 : vector<8x128xf32>
    %31 = math.absf %25 : vector<8x128xf32>
    %cst_9 = arith.constant 0.000000e+00 : f32
    %32 = vector.broadcast %cst_9 : f32 to vector<8x128xf32>
    %33 = arith.subf %32, %31 : vector<8x128xf32>
    %34 = math.exp %33 : vector<8x128xf32>
    %35 = math.log1p %34 : vector<8x128xf32>
    %36 = arith.addf %30, %35 : vector<8x128xf32>
    %c0_10 = arith.constant 0 : index
    %c0_11 = arith.constant 0 : index
    %37 = vector.load %arg4[%c0_10, %c0_11] : memref<8x128xf32, #tpu.memory_space<vmem>>, vector<8x128xf32>
    tpu.vector_store %arg4[%c0_10, %c0_11], %36 {strides = array<i32>} : memref<8x128xf32, #tpu.memory_space<vmem>>, vector<8x128xf32>,
    return
  }
  func.func @transform_0(%arg0: i32) -> (i32, i32) {
    %c0_i32 = arith.constant 0 : i32
    %c0_i32_0 = arith.constant 0 : i32
    return %arg0, %c0_i32 : i32, i32
  }
  func.func @transform_1(%arg0: i32) -> (i32, i32) {
    %c0_i32 = arith.constant 0 : i32
    %c0_i32_0 = arith.constant 0 : i32
    return %arg0, %c0_i32 : i32, i32
  }
  func.func @transform_2(%arg0: i32) -> (i32, i32) {
    %c0_i32 = arith.constant 0 : i32
    %c0_i32_0 = arith.constant 0 : i32
    return %arg0, %c0_i32 : i32, i32
  }
  func.func @transform_3(%arg0: i32) -> (i32, i32) {
    %c0_i32 = arith.constant 0 : i32
    %c0_i32_0 = arith.constant 0 : i32
    return %arg0, %c0_i32 : i32, i32
  }
}

</mosaic_0001>

<llo_original>
// kernel: tpu_custom_call.1
$region0: #{tpu_custom_call.1}
  #allocation0 [shape = 'u32[]', space=smem, size = 0x4, offset = 0x4, fixed_abs, tag = 'smem constant byte address 0x4 - core index']
  #allocation1 [shape = 'u32[144,128]{1,0:T(1,128)}', space=vmem, size = 0x12000, scoped, tag = 'internal scratch']
  %s0 = inlined_call_operand.vmem [shape: f32[8,128], index: 0, kind: input, shape index: {}]
  %s1 = inlined_call_operand.hbm [shape: f32[8,128], index: 1, kind: input, shape index: {}]
  %s2 = inlined_call_operand.vmem [shape: f32[8,1], index: 2, kind: input, shape index: {}]
  %s3 = inlined_call_operand.hbm [shape: f32[8,128], index: 3, kind: output, shape index: {}]
  %s4 = sld [smem:[#allocation0]]
  $region26: #{tpu_custom_call.1} parent=0
    _
  %s6 = ssub.s32 1, %s4
  %s7 = scalar_select 0, %s6, %s4
  $region1: #{tpu_custom_call.1} parent=0
    #allocation2 [shape = 'u8[4096]{0}', space=vmem, size = 0x1000, scoped, tag = 'input window, operand 1, single buffered']
    #allocation3 [shape = 's32[1]{0}', space=sflag, size = 0x4, scoped, tag = 'scoped memory for tpu_custom_call.1']
    #allocation4 [shape = 's32[1]{0}', space=sflag, size = 0x4, scoped, tag = 'scoped memory for tpu_custom_call.1']
    #allocation5 [shape = 'u8[4096]{0}', space=vmem, size = 0x1000, scoped, tag = 'output window, operand 0, single buffered']
    %8 = vsyncpa [#allocation3], 0
    %9 = vsyncpa [#allocation4], 0
    // Predicated region
    $region2: #{tpu_custom_call.1} parent=1 // pred_check
      _
    $region3: #{tpu_custom_call.1} parent=1 // pred_check_branch
      %11 = sbr.rel (0) target = $region5
    $region4: #{tpu_custom_call.1} parent=1 // pred_region
      _
    $region5: #{tpu_custom_call.1} parent=1 // pred_fallthru
      _
    // Predicated region
    $region6: #{tpu_custom_call.1} parent=1 // pred_check
      _
    $region7: #{tpu_custom_call.1} parent=1 // pred_check_branch
      %13 = sbr.rel (0) target = $region9
    $region8: #{tpu_custom_call.1} parent=1 // pred_region
      %s15 = ssub.s32 128, 128
      %16 = vsyncadd [#allocation3], %s15
      %s18 = sshll.u32 [#allocation2], 4
      %s19 = int_to_ptr.vmem [resolvable:$true] %s18
      %21 = dma.hbm_to_vmem [thread:$0]  %s1, 128, %s19, [#allocation3]
    $region9: #{tpu_custom_call.1} parent=1 // pred_fallthru
      _
    // Predicated region
    $region10: #{tpu_custom_call.1} parent=1 // pred_check
      _
    $region11: #{tpu_custom_call.1} parent=1 // pred_check_branch
      %23 = sbr.rel (0) target = $region13
    $region12: #{tpu_custom_call.1} parent=1 // pred_region
      _
    $region13: #{tpu_custom_call.1} parent=1 // pred_fallthru
      _
    // Predicated region
    $region14: #{tpu_custom_call.1} parent=1 // pred_check
      _
    $region15: #{tpu_custom_call.1} parent=1 // pred_check_branch
      %25 = sbr.rel (0) target = $region17
    $region16: #{tpu_custom_call.1} parent=1 // pred_region
      %26 = dma.done [#allocation3], 128
    $region17: #{tpu_custom_call.1} parent=1 // pred_fallthru
      _
    %v27 = vld [vmem:[%s0] sm:$0xff]
    %v28 = vld [vmem:[#allocation2] sm:$0xff]
    %29 = vmax.xlane.f32.xlu0 %v27
    %v30 = vpop.xlane.xlu0 %29
    %v31 = vsub.f32 %v27, %v30
    %v32 = vmul.f32 %v31, 1.442695
    %v33 = vpow.pop %v32
    %34 = vadd.xlane.f32.xlu0 %v33
    %v35 = vpop.xlane.xlu0 %34
    %v36 = vlog2.pop %v35
    %v37 = vmul.f32 %v36, 0.6931472
    %v38 = vadd.f32 %v30, %v37
    %39 = vmax.xlane.f32.xlu0 %v28
    %v40 = vpop.xlane.xlu0 %39
    %v41 = vsub.f32 %v28, %v40
    %v42 = vmul.f32 %v41, 1.442695
    %v43 = vpow.pop %v42
    %44 = vadd.xlane.f32.xlu0 %v43
    %v45 = vpop.xlane.xlu0 %44
    %v46 = vlog2.pop %v45
    %v47 = vmul.f32 %v46, 0.6931472
    %v48 = vadd.f32 %v40, %v47
    %v49 = vld [vmem:[%s2] sm:$0xff]
    %v50 = vsub.f32 %v49, %v38
    %v51 = vadd.f32 %v50, %v48
    %v52 = vsub.f32 %v27, %v28
    %54 = vset.pattern.permute.xlu0 0
    %55 = vperm.xlu0 %54, %v51
    %v56 = vpop.permute.xlu0 %55
    %v58 = vadd.f32 %v52, %v56
    %v59 = vsub.f32 %v28, %v48
    %v60 = vmax.f32 %v58, 0.0
    %v61 = vadd.f32 %v59, %v60
    %v62 = vand.u32 2147483647, %v58
    %v63 = vsub.f32 0.0, %v62
    %v64 = vmul.f32 %v63, 1.442695
    %v65 = vpow.pop %v64
    %v66 = vadd.f32 %v65, 1.0
    %v67 = vlog2.pop %v66
    %v68 = vmul.f32 %v67, 0.6931472
    %v69 = vmul.f32 -0.5, %v65
    %v70 = vadd.f32 %v69, 1.0
    %v71 = vmul.f32 %v70, %v65
    %v72 = vand.u32 2147483647, %v65
    %vm73 = vcmp.lt.f32.partialorder %v72, 0.0004427343
    %v74 = vsel %vm73, %v71, %v68
    %v75 = vadd.f32 %v61, %v74
    %76 = vst [vmem:[#allocation5] sm:$0xff] %v75
    // Predicated region
    $region18: #{tpu_custom_call.1} parent=1 // pred_check
      _
    $region19: #{tpu_custom_call.1} parent=1 // pred_check_branch
      %78 = sbr.rel (0) target = $region21
    $region20: #{tpu_custom_call.1} parent=1 // pred_region
      %s80 = ssub.s32 128, 128
      %81 = vsyncadd [#allocation4], %s80
      %s83 = sshll.u32 [#allocation5], 4
      %s84 = int_to_ptr.vmem [resolvable:$true] %s83
      %86 = dma.vmem_to_hbm [thread:$0]  %s84, 128, %s3, [#allocation4]
    $region21: #{tpu_custom_call.1} parent=1 // pred_fallthru
      _
    // Predicated region
    $region22: #{tpu_custom_call.1} parent=1 // pred_check
      _
    $region23: #{tpu_custom_call.1} parent=1 // pred_check_branch
      %88 = sbr.rel (0) target = $region25
    $region24: #{tpu_custom_call.1} parent=1 // pred_region
      %89 = dma.done [#allocation4], 128
    $region25: #{tpu_custom_call.1} parent=1 // pred_fallthru
      _
    %90 = vsyncpa [#allocation3], 1
    %91 = vsyncpa [#allocation4], 1

</llo_original>
